<compile_context>
chip_gen: v6e
topology: v6e:2x2x1
jax: 0.10.0
libtpu: 0.0.40
codegen_flags: <defaults>
</compile_context>

<pallas_src>
import jax
import jax.numpy as jnp
from jax import lax
from jax.experimental import pallas as pl
from jax.experimental.pallas import tpu as pltpu


def _round_up(x, m):
    return (x + m - 1) // m * m


def _rnn_recurrence_kernel(xw_ref, whh_ref, hs_ref, h_ref):
    """One grid step = T_BLK timesteps of  h_t = tanh(xw_t + h_{t-1} @ W_hh^T).

    xw_ref : (T_BLK, B, H)  precomputed x_t @ W_ih^T + (b_ih + b_hh)
    whh_ref: (H, H)         W_hh^T (constant index_map -> stays VMEM resident)
    hs_ref : (T_BLK, B, H)  all hidden states for this time block (output)
    h_ref  : (B, H) VMEM    hidden-state carry across grid steps
    """
    @pl.when(pl.program_id(0) == 0)
    def _():
        h_ref[...] = jnp.zeros_like(h_ref)

    t_blk = xw_ref.shape[0]
    whh = whh_ref[...]

    def step(t, h):
        pre = xw_ref[t] + jnp.dot(h, whh, preferred_element_type=jnp.float32)
        h_new = jnp.tanh(pre)
        hs_ref[t] = h_new.astype(hs_ref.dtype)
        return h_new

    # Carry h in registers across the unrolled window; write the VMEM carry
    # only once per grid step.
    h_ref[...] = lax.fori_loop(0, t_blk, step, h_ref[...], unroll=True)


def _rnn_hidden_states_padded(xw, whh_t, *, t_blk):
    """xw: (S_pad, B_pad, H) f32, seq-major.  Returns hs (S_pad, B_pad, H)."""
    S_pad, B_pad, H = xw.shape
    assert S_pad % t_blk == 0

    return pl.pallas_call(
        _rnn_recurrence_kernel,
        out_shape=jax.ShapeDtypeStruct((S_pad, B_pad, H), jnp.float32),
        grid_spec=pltpu.PrefetchScalarGridSpec(
            num_scalar_prefetch=0,
            grid=(S_pad // t_blk,),
            in_specs=[
                # xw time block
                pl.BlockSpec((t_blk, B_pad, H), lambda tb: (tb, 0, 0)),
                # W_hh^T: constant block (not re-fetched per step).  For large
                # H, single-buffer this (pl.Buffered(1)) or use bf16 weights.
                pl.BlockSpec((H, H), lambda tb: (0, 0)),
            ],
            out_specs=pl.BlockSpec((t_blk, B_pad, H), lambda tb: (tb, 0, 0)),
            scratch_shapes=[pltpu.VMEM((B_pad, H), jnp.float32)],
        ),
        compiler_params=pltpu.CompilerParams(
            dimension_semantics=("arbitrary",)),  # recurrence => sequential
    )(xw, whh_t)


def _rnn_hidden_seq_major(x, params, *, t_blk=8):
    """x: (B, S, I) f32.  Returns hidden states (S, B, H) f32 (seq-major)."""
    B, S, I = x.shape
    H = params["w_hh"].shape[0]

    wih_t = params["w_ih"].T.astype(jnp.float32)                  # (I, H)
    whh_t = params["w_hh"].T.astype(jnp.float32)                  # (H, H)
    bias = (params["b_ih"] + params["b_hh"]).astype(jnp.float32)  # (H,)

    # Hoisted, fully parallel input projection; fuses the batch_first ->
    # sequence-major transpose into the matmul.
    xw = jnp.einsum("bsi,ih->sbh", x, wih_t,
                    preferred_element_type=jnp.float32) + bias    # (S, B, H)

    # Pad batch to a sublane multiple and seq to a multiple of the time block.
    t_blk = max(1, min(t_blk, S))
    B_pad = max(_round_up(B, 8), 8)
    S_pad = _round_up(S, t_blk)
    xw_p = jnp.zeros((S_pad, B_pad, H), jnp.float32)
    xw_p = xw_p.at[:S, :B, :].set(xw)

    hs_p = _rnn_hidden_states_padded(xw_p, whh_t, t_blk=t_blk)    # padded
    return hs_p[:S, :B, :]                                        # (S, B, H)


def seq2seq(x, params):
    """x: (B, S, I) -> (B, S, O)."""
    hs = _rnn_hidden_seq_major(x, params)                         # (S, B, H)
    wfc_t = params["w_fc"].T.astype(jnp.float32)                  # (H, O)
    # Single big FC matmul outside the recurrence; fuses transpose back to
    # batch_first.
    return jnp.einsum("sbh,ho->bso", hs, wfc_t,
                      preferred_element_type=jnp.float32) + params["b_fc"]


def seq2class(x, params):
    """x: (B, S, I) -> (B, O).  FC applied only to the last hidden state."""
    hs = _rnn_hidden_seq_major(x, params)                         # (S, B, H)
    h_last = hs[-1]                                               # (B, H)
    return (jnp.dot(h_last, params["w_fc"].T,
                    preferred_element_type=jnp.float32) + params["b_fc"])


def _init_params(key, input_size, hidden_size, output_size):
    ks = jax.random.split(key, 6)
    s_rnn = 1.0 / jnp.sqrt(hidden_size)
    s_fc = 1.0 / jnp.sqrt(hidden_size)
    return {
        "w_ih": jax.random.uniform(ks[0], (hidden_size, input_size),
                                   jnp.float32, -s_rnn, s_rnn),
        "w_hh": jax.random.uniform(ks[1], (hidden_size, hidden_size),
                                   jnp.float32, -s_rnn, s_rnn),
        "b_ih": jax.random.uniform(ks[2], (hidden_size,),
                                   jnp.float32, -s_rnn, s_rnn),
        "b_hh": jax.random.uniform(ks[3], (hidden_size,),
                                   jnp.float32, -s_rnn, s_rnn),
        "w_fc": jax.random.uniform(ks[4], (output_size, hidden_size),
                                   jnp.float32, -s_fc, s_fc),
        "b_fc": jax.random.uniform(ks[5], (output_size,),
                                   jnp.float32, -s_fc, s_fc),
    }


def _reference(x, params):
    """Pure-JAX reference (matches torch nn.RNN(tanh) + Linear)."""
    def step(h, x_t):
        h_new = jnp.tanh(x_t @ params["w_ih"].T + params["b_ih"]
                         + h @ params["w_hh"].T + params["b_hh"])
        return h_new, h_new
    B = x.shape[0]
    h0 = jnp.zeros((B, params["w_hh"].shape[0]), jnp.float32)
    _, hs = jax.lax.scan(step, h0, jnp.transpose(x, (1, 0, 2)))   # (S, B, H)
    hs = jnp.transpose(hs, (1, 0, 2))                             # (B, S, H)
    return hs @ params["w_fc"].T + params["b_fc"]


if __name__ == "__main__":
    B, S = 2, 8
    input_size, hidden_size, output_size = 16, 32, 8

    key = jax.random.PRNGKey(0)
    k_x, k_p = jax.random.split(key)
    x = jax.random.normal(k_x, (B, S, input_size), jnp.float32)
    params = _init_params(k_p, input_size, hidden_size, output_size)

    out_seq = jax.block_until_ready(seq2seq(x, params))      # (B, S, O)
    out_cls = jax.block_until_ready(seq2class(x, params))    # (B, O)

    ref = _reference(x, params)
    assert out_seq.shape == (B, S, output_size)
    assert out_cls.shape == (B, output_size)
    assert jnp.allclose(out_seq, ref, atol=1e-4, rtol=1e-4)
    assert jnp.allclose(out_cls, ref[:, -1, :], atol=1e-4, rtol=1e-4)

    print("KERNEL_OK")
</pallas_src>

<mosaic_0001>
module attributes {stable_mosaic.version = 11 : i64} {
  func.func @_rnn_recurrence_kernel(%arg0: i32, %arg1: memref<8x8x32xf32, #tpu.memory_space<vmem>>, %arg2: memref<32x32xf32, #tpu.memory_space<vmem>>, %arg3: memref<8x8x32xf32, #tpu.memory_space<vmem>>, %arg4: memref<8x32xf32, #tpu.memory_space<vmem>>) attributes {dimension_semantics = [#tpu.dimension_semantics<arbitrary>], iteration_bounds = array<i64: 1>, scalar_prefetch = 0 : i64, scratch_operands = 1 : i64, tpu.core_type = #tpu.core_type<tc>, window_params = [{transform_indices = @transform_0, window_bounds = array<i64: 8, 8, 32>}, {pipeline_mode = #tpu.pipeline_mode<synchronous>, transform_indices = @transform_1, window_bounds = array<i64: 32, 32>}, {transform_indices = @transform_2, window_bounds = array<i64: 8, 8, 32>}]} {
    %c0_i32 = arith.constant 0 : i32
    %0 = arith.cmpi eq, %arg0, %c0_i32 : i32
    %1 = arith.extui %0 : i1 to i32
    %c0_i32_0 = arith.constant 0 : i32
    %2 = arith.cmpi ne, %1, %c0_i32_0 : i32
    scf.if %2 {
      %cst_46 = arith.constant 0.000000e+00 : f32
      %86 = vector.broadcast %cst_46 : f32 to vector<8x32xf32>
      %c0_47 = arith.constant 0 : index
      %c0_48 = arith.constant 0 : index
      %87 = vector.load %arg4[%c0_47, %c0_48] : memref<8x32xf32, #tpu.memory_space<vmem>>, vector<8x32xf32>
      tpu.vector_store %arg4[%c0_47, %c0_48], %86 {strides = array<i32>} : memref<8x32xf32, #tpu.memory_space<vmem>>, vector<8x32xf32>,
    } else {
    }
    %c0 = arith.constant 0 : index
    %c0_1 = arith.constant 0 : index
    %3 = vector.load %arg2[%c0, %c0_1] : memref<32x32xf32, #tpu.memory_space<vmem>>, vector<32x32xf32>
    %c0_2 = arith.constant 0 : index
    %c0_3 = arith.constant 0 : index
    %4 = vector.load %arg4[%c0_2, %c0_3] : memref<8x32xf32, #tpu.memory_space<vmem>>, vector<8x32xf32>
    %c0_i32_4 = arith.constant 0 : i32
    %5 = arith.index_cast %c0_i32_4 : i32 to index
    %c0_5 = arith.constant 0 : index
    %c0_6 = arith.constant 0 : index
    %6 = vector.load %arg1[%5, %c0_5, %c0_6] : memref<8x8x32xf32, #tpu.memory_space<vmem>>, vector<1x8x32xf32>
    %7 = vector.shape_cast %6 : vector<1x8x32xf32> to vector<8x32xf32>
    %cst = arith.constant dense<0.000000e+00> : vector<8x32xf32>
    %8 = tpu.matmul %4, %3, %cst {dimension_numbers = #tpu.dot_dimension_numbers<[1], [0], [0], [1], [0, 0, 1, 1], [], []>} : vector<8x32xf32>, vector<32x32xf32>, vector<8x32xf32> -> vector<8x32xf32>
    %9 = arith.addf %7, %8 : vector<8x32xf32>
    %10 = math.tanh %9 : vector<8x32xf32>
    %11 = arith.index_cast %c0_i32_4 : i32 to index
    %c0_7 = arith.constant 0 : index
    %c0_8 = arith.constant 0 : index
    %12 = vector.load %arg3[%11, %c0_7, %c0_8] : memref<8x8x32xf32, #tpu.memory_space<vmem>>, vector<1x8x32xf32>
    %13 = vector.shape_cast %12 : vector<1x8x32xf32> to vector<8x32xf32>
    %14 = vector.shape_cast %10 : vector<8x32xf32> to vector<1x8x32xf32>
    tpu.vector_store %arg3[%11, %c0_7, %c0_8], %14 {strides = array<i32>} : memref<8x8x32xf32, #tpu.memory_space<vmem>>, vector<1x8x32xf32>,
    %c1_i32 = arith.constant 1 : i32
    %15 = arith.index_cast %c1_i32 : i32 to index
    %c0_9 = arith.constant 0 : index
    %c0_10 = arith.constant 0 : index
    %16 = vector.load %arg1[%15, %c0_9, %c0_10] : memref<8x8x32xf32, #tpu.memory_space<vmem>>, vector<1x8x32xf32>
    %17 = vector.shape_cast %16 : vector<1x8x32xf32> to vector<8x32xf32>
    %cst_11 = arith.constant dense<0.000000e+00> : vector<8x32xf32>
    %18 = tpu.matmul %10, %3, %cst_11 {dimension_numbers = #tpu.dot_dimension_numbers<[1], [0], [0], [1], [0, 0, 1, 1], [], []>} : vector<8x32xf32>, vector<32x32xf32>, vector<8x32xf32> -> vector<8x32xf32>
    %19 = arith.addf %17, %18 : vector<8x32xf32>
    %20 = math.tanh %19 : vector<8x32xf32>
    %21 = arith.index_cast %c1_i32 : i32 to index
    %c0_12 = arith.constant 0 : index
    %c0_13 = arith.constant 0 : index
    %22 = vector.load %arg3[%21, %c0_12, %c0_13] : memref<8x8x32xf32, #tpu.memory_space<vmem>>, vector<1x8x32xf32>
    %23 = vector.shape_cast %22 : vector<1x8x32xf32> to vector<8x32xf32>
    %24 = vector.shape_cast %20 : vector<8x32xf32> to vector<1x8x32xf32>
    tpu.vector_store %arg3[%21, %c0_12, %c0_13], %24 {strides = array<i32>} : memref<8x8x32xf32, #tpu.memory_space<vmem>>, vector<1x8x32xf32>,
    %c2_i32 = arith.constant 2 : i32
    %25 = arith.index_cast %c2_i32 : i32 to index
    %c0_14 = arith.constant 0 : index
    %c0_15 = arith.constant 0 : index
    %26 = vector.load %arg1[%25, %c0_14, %c0_15] : memref<8x8x32xf32, #tpu.memory_space<vmem>>, vector<1x8x32xf32>
    %27 = vector.shape_cast %26 : vector<1x8x32xf32> to vector<8x32xf32>
    %cst_16 = arith.constant dense<0.000000e+00> : vector<8x32xf32>
    %28 = tpu.matmul %20, %3, %cst_16 {dimension_numbers = #tpu.dot_dimension_numbers<[1], [0], [0], [1], [0, 0, 1, 1], [], []>} : vector<8x32xf32>, vector<32x32xf32>, vector<8x32xf32> -> vector<8x32xf32>
    %29 = arith.addf %27, %28 : vector<8x32xf32>
    %30 = math.tanh %29 : vector<8x32xf32>
    %31 = arith.index_cast %c2_i32 : i32 to index
    %c0_17 = arith.constant 0 : index
    %c0_18 = arith.constant 0 : index
    %32 = vector.load %arg3[%31, %c0_17, %c0_18] : memref<8x8x32xf32, #tpu.memory_space<vmem>>, vector<1x8x32xf32>
    %33 = vector.shape_cast %32 : vector<1x8x32xf32> to vector<8x32xf32>
    %34 = vector.shape_cast %30 : vector<8x32xf32> to vector<1x8x32xf32>
    tpu.vector_store %arg3[%31, %c0_17, %c0_18], %34 {strides = array<i32>} : memref<8x8x32xf32, #tpu.memory_space<vmem>>, vector<1x8x32xf32>,
    %c3_i32 = arith.constant 3 : i32
    %35 = arith.index_cast %c3_i32 : i32 to index
    %c0_19 = arith.constant 0 : index
    %c0_20 = arith.constant 0 : index
    %36 = vector.load %arg1[%35, %c0_19, %c0_20] : memref<8x8x32xf32, #tpu.memory_space<vmem>>, vector<1x8x32xf32>
    %37 = vector.shape_cast %36 : vector<1x8x32xf32> to vector<8x32xf32>
    %cst_21 = arith.constant dense<0.000000e+00> : vector<8x32xf32>
    %38 = tpu.matmul %30, %3, %cst_21 {dimension_numbers = #tpu.dot_dimension_numbers<[1], [0], [0], [1], [0, 0, 1, 1], [], []>} : vector<8x32xf32>, vector<32x32xf32>, vector<8x32xf32> -> vector<8x32xf32>
    %39 = arith.addf %37, %38 : vector<8x32xf32>
    %40 = math.tanh %39 : vector<8x32xf32>
    %41 = arith.index_cast %c3_i32 : i32 to index
    %c0_22 = arith.constant 0 : index
    %c0_23 = arith.constant 0 : index
    %42 = vector.load %arg3[%41, %c0_22, %c0_23] : memref<8x8x32xf32, #tpu.memory_space<vmem>>, vector<1x8x32xf32>
    %43 = vector.shape_cast %42 : vector<1x8x32xf32> to vector<8x32xf32>
    %44 = vector.shape_cast %40 : vector<8x32xf32> to vector<1x8x32xf32>
    tpu.vector_store %arg3[%41, %c0_22, %c0_23], %44 {strides = array<i32>} : memref<8x8x32xf32, #tpu.memory_space<vmem>>, vector<1x8x32xf32>,
    %c4_i32 = arith.constant 4 : i32
    %45 = arith.index_cast %c4_i32 : i32 to index
    %c0_24 = arith.constant 0 : index
    %c0_25 = arith.constant 0 : index
    %46 = vector.load %arg1[%45, %c0_24, %c0_25] : memref<8x8x32xf32, #tpu.memory_space<vmem>>, vector<1x8x32xf32>
    %47 = vector.shape_cast %46 : vector<1x8x32xf32> to vector<8x32xf32>
    %cst_26 = arith.constant dense<0.000000e+00> : vector<8x32xf32>
    %48 = tpu.matmul %40, %3, %cst_26 {dimension_numbers = #tpu.dot_dimension_numbers<[1], [0], [0], [1], [0, 0, 1, 1], [], []>} : vector<8x32xf32>, vector<32x32xf32>, vector<8x32xf32> -> vector<8x32xf32>
    %49 = arith.addf %47, %48 : vector<8x32xf32>
    %50 = math.tanh %49 : vector<8x32xf32>
    %51 = arith.index_cast %c4_i32 : i32 to index
    %c0_27 = arith.constant 0 : index
    %c0_28 = arith.constant 0 : index
    %52 = vector.load %arg3[%51, %c0_27, %c0_28] : memref<8x8x32xf32, #tpu.memory_space<vmem>>, vector<1x8x32xf32>
    %53 = vector.shape_cast %52 : vector<1x8x32xf32> to vector<8x32xf32>
    %54 = vector.shape_cast %50 : vector<8x32xf32> to vector<1x8x32xf32>
    tpu.vector_store %arg3[%51, %c0_27, %c0_28], %54 {strides = array<i32>} : memref<8x8x32xf32, #tpu.memory_space<vmem>>, vector<1x8x32xf32>,
    %c5_i32 = arith.constant 5 : i32
    %55 = arith.index_cast %c5_i32 : i32 to index
    %c0_29 = arith.constant 0 : index
    %c0_30 = arith.constant 0 : index
    %56 = vector.load %arg1[%55, %c0_29, %c0_30] : memref<8x8x32xf32, #tpu.memory_space<vmem>>, vector<1x8x32xf32>
    %57 = vector.shape_cast %56 : vector<1x8x32xf32> to vector<8x32xf32>
    %cst_31 = arith.constant dense<0.000000e+00> : vector<8x32xf32>
    %58 = tpu.matmul %50, %3, %cst_31 {dimension_numbers = #tpu.dot_dimension_numbers<[1], [0], [0], [1], [0, 0, 1, 1], [], []>} : vector<8x32xf32>, vector<32x32xf32>, vector<8x32xf32> -> vector<8x32xf32>
    %59 = arith.addf %57, %58 : vector<8x32xf32>
    %60 = math.tanh %59 : vector<8x32xf32>
    %61 = arith.index_cast %c5_i32 : i32 to index
    %c0_32 = arith.constant 0 : index
    %c0_33 = arith.constant 0 : index
    %62 = vector.load %arg3[%61, %c0_32, %c0_33] : memref<8x8x32xf32, #tpu.memory_space<vmem>>, vector<1x8x32xf32>
    %63 = vector.shape_cast %62 : vector<1x8x32xf32> to vector<8x32xf32>
    %64 = vector.shape_cast %60 : vector<8x32xf32> to vector<1x8x32xf32>
    tpu.vector_store %arg3[%61, %c0_32, %c0_33], %64 {strides = array<i32>} : memref<8x8x32xf32, #tpu.memory_space<vmem>>, vector<1x8x32xf32>,
    %c6_i32 = arith.constant 6 : i32
    %65 = arith.index_cast %c6_i32 : i32 to index
    %c0_34 = arith.constant 0 : index
    %c0_35 = arith.constant 0 : index
    %66 = vector.load %arg1[%65, %c0_34, %c0_35] : memref<8x8x32xf32, #tpu.memory_space<vmem>>, vector<1x8x32xf32>
    %67 = vector.shape_cast %66 : vector<1x8x32xf32> to vector<8x32xf32>
    %cst_36 = arith.constant dense<0.000000e+00> : vector<8x32xf32>
    %68 = tpu.matmul %60, %3, %cst_36 {dimension_numbers = #tpu.dot_dimension_numbers<[1], [0], [0], [1], [0, 0, 1, 1], [], []>} : vector<8x32xf32>, vector<32x32xf32>, vector<8x32xf32> -> vector<8x32xf32>
    %69 = arith.addf %67, %68 : vector<8x32xf32>
    %70 = math.tanh %69 : vector<8x32xf32>
    %71 = arith.index_cast %c6_i32 : i32 to index
    %c0_37 = arith.constant 0 : index
    %c0_38 = arith.constant 0 : index
    %72 = vector.load %arg3[%71, %c0_37, %c0_38] : memref<8x8x32xf32, #tpu.memory_space<vmem>>, vector<1x8x32xf32>
    %73 = vector.shape_cast %72 : vector<1x8x32xf32> to vector<8x32xf32>
    %74 = vector.shape_cast %70 : vector<8x32xf32> to vector<1x8x32xf32>
    tpu.vector_store %arg3[%71, %c0_37, %c0_38], %74 {strides = array<i32>} : memref<8x8x32xf32, #tpu.memory_space<vmem>>, vector<1x8x32xf32>,
    %c7_i32 = arith.constant 7 : i32
    %75 = arith.index_cast %c7_i32 : i32 to index
    %c0_39 = arith.constant 0 : index
    %c0_40 = arith.constant 0 : index
    %76 = vector.load %arg1[%75, %c0_39, %c0_40] : memref<8x8x32xf32, #tpu.memory_space<vmem>>, vector<1x8x32xf32>
    %77 = vector.shape_cast %76 : vector<1x8x32xf32> to vector<8x32xf32>
    %cst_41 = arith.constant dense<0.000000e+00> : vector<8x32xf32>
    %78 = tpu.matmul %70, %3, %cst_41 {dimension_numbers = #tpu.dot_dimension_numbers<[1], [0], [0], [1], [0, 0, 1, 1], [], []>} : vector<8x32xf32>, vector<32x32xf32>, vector<8x32xf32> -> vector<8x32xf32>
    %79 = arith.addf %77, %78 : vector<8x32xf32>
    %80 = math.tanh %79 : vector<8x32xf32>
    %81 = arith.index_cast %c7_i32 : i32 to index
    %c0_42 = arith.constant 0 : index
    %c0_43 = arith.constant 0 : index
    %82 = vector.load %arg3[%81, %c0_42, %c0_43] : memref<8x8x32xf32, #tpu.memory_space<vmem>>, vector<1x8x32xf32>
    %83 = vector.shape_cast %82 : vector<1x8x32xf32> to vector<8x32xf32>
    %84 = vector.shape_cast %80 : vector<8x32xf32> to vector<1x8x32xf32>
    tpu.vector_store %arg3[%81, %c0_42, %c0_43], %84 {strides = array<i32>} : memref<8x8x32xf32, #tpu.memory_space<vmem>>, vector<1x8x32xf32>,
    %c8_i32 = arith.constant 8 : i32
    %c0_44 = arith.constant 0 : index
    %c0_45 = arith.constant 0 : index
    %85 = vector.load %arg4[%c0_44, %c0_45] : memref<8x32xf32, #tpu.memory_space<vmem>>, vector<8x32xf32>
    tpu.vector_store %arg4[%c0_44, %c0_45], %80 {strides = array<i32>} : memref<8x32xf32, #tpu.memory_space<vmem>>, vector<8x32xf32>,
    return
  }
  func.func @transform_0(%arg0: i32) -> (i32, i32, i32) {
    %c0_i32 = arith.constant 0 : i32
    %c0_i32_0 = arith.constant 0 : i32
    %c0_i32_1 = arith.constant 0 : i32
    return %arg0, %c0_i32, %c0_i32_0 : i32, i32, i32
  }
  func.func @transform_1(%arg0: i32) -> (i32, i32) {
    %c0_i32 = arith.constant 0 : i32
    %c0_i32_0 = arith.constant 0 : i32
    %c0_i32_1 = arith.constant 0 : i32
    return %c0_i32, %c0_i32_0 : i32, i32
  }
  func.func @transform_2(%arg0: i32) -> (i32, i32, i32) {
    %c0_i32 = arith.constant 0 : i32
    %c0_i32_0 = arith.constant 0 : i32
    %c0_i32_1 = arith.constant 0 : i32
    return %arg0, %c0_i32, %c0_i32_0 : i32, i32, i32
  }
}

</mosaic_0001>

<llo_original>
// kernel: tpu_custom_call.1
$region0: #{tpu_custom_call.1}
  #allocation0 [shape = 'u32[]', space=smem, size = 0x4, offset = 0x4, fixed_abs, tag = 'smem constant byte address 0x4 - core index']
  #allocation1 [shape = 'u32[144,128]{1,0:T(1,128)}', space=vmem, size = 0x12000, scoped, tag = 'internal scratch']
  #allocation2 [shape = 'f32[8,32]{1,0:T(8,128)}', space=vmem, size = 0x1000, scoped, tag = 'scratch operand']
  %s0 = inlined_call_operand.hbm [shape: f32[8,8,32], index: 0, kind: input, shape index: {}]
  %s1 = inlined_call_operand.hbm [shape: f32[32,32], index: 1, kind: input, shape index: {}]
  %s2 = inlined_call_operand.hbm [shape: f32[8,8,32], index: 2, kind: output, shape index: {}]
  %s3 = sld [smem:[#allocation0]]
  $region30: #{tpu_custom_call.1} parent=0
    _
  %s5 = ssub.s32 1, %s3
  %s6 = scalar_select 0, %s5, %s3
  $region1: #{tpu_custom_call.1} parent=0
    #allocation3 [shape = 'u8[32768]{0}', space=vmem, size = 0x8000, scoped, tag = 'input window, operand 0, single buffered']
    #allocation4 [shape = 's32[1]{0}', space=sflag, size = 0x4, scoped, tag = 'scoped memory for tpu_custom_call.1']
    #allocation5 [shape = 's32[1]{0}', space=sflag, size = 0x4, scoped, tag = 'scoped memory for tpu_custom_call.1']
    #allocation6 [shape = 'u8[16384]{0}', space=vmem, size = 0x4000, scoped, tag = 'input window, operand 1, single buffered']
    #allocation7 [shape = 's32[1]{0}', space=sflag, size = 0x4, scoped, tag = 'scoped memory for tpu_custom_call.1']
    #allocation8 [shape = 'u8[32768]{0}', space=vmem, size = 0x8000, scoped, tag = 'output window, operand 0, single buffered']
    %7 = vsyncpa [#allocation4], 0
    %8 = vsyncpa [#allocation7], 0
    %9 = vsyncpa [#allocation5], 0
    // Predicated region
    $region2: #{tpu_custom_call.1} parent=1 // pred_check
      _
    $region3: #{tpu_custom_call.1} parent=1 // pred_check_branch
      %11 = sbr.rel (0) target = $region5
    $region4: #{tpu_custom_call.1} parent=1 // pred_region
      %s13 = ssub.s32 1024, 1024
      %14 = vsyncadd [#allocation4], %s13
      %s15 = sshll.u32 [#allocation3], 4
      %s16 = int_to_ptr.vmem [resolvable:$true] %s15
      %21 = dma.hbm_to_vmem [thread:$0]  %s0, 1024, %s16, [#allocation4], 128, 128, 8
    $region5: #{tpu_custom_call.1} parent=1 // pred_fallthru
      _
    // Predicated region
    $region6: #{tpu_custom_call.1} parent=1 // pred_check
      _
    $region7: #{tpu_custom_call.1} parent=1 // pred_check_branch
      %23 = sbr.rel (0) target = $region9
    $region8: #{tpu_custom_call.1} parent=1 // pred_region
      %s25 = ssub.s32 512, 512
      %26 = vsyncadd [#allocation7], %s25
      %s27 = sshll.u32 [#allocation6], 4
      %s28 = int_to_ptr.vmem [resolvable:$true] %s27
      %33 = dma.hbm_to_vmem [thread:$0]  %s1, 512, %s28, [#allocation7], 128, 128, 8
    $region9: #{tpu_custom_call.1} parent=1 // pred_fallthru
      _
    // Predicated region
    $region10: #{tpu_custom_call.1} parent=1 // pred_check
      _
    $region11: #{tpu_custom_call.1} parent=1 // pred_check_branch
      %35 = sbr.rel (0) target = $region13
    $region12: #{tpu_custom_call.1} parent=1 // pred_region
      %36 = dma.done [#allocation4], 1024
    $region13: #{tpu_custom_call.1} parent=1 // pred_fallthru
      _
    // Predicated region
    $region14: #{tpu_custom_call.1} parent=1 // pred_check
      _
    $region15: #{tpu_custom_call.1} parent=1 // pred_check_branch
      %38 = sbr.rel (0) target = $region17
    $region16: #{tpu_custom_call.1} parent=1 // pred_region
      %39 = dma.done [#allocation7], 512
    $region17: #{tpu_custom_call.1} parent=1 // pred_fallthru
      _
    %p40 = scmp.eq.s32.totalorder 0, 0
    // Predicated region
    $region18: #{tpu_custom_call.1} parent=1 // pred_check
      %p41 = pneg %p40
    $region19: #{tpu_custom_call.1} parent=1 // pred_check_branch
      %43 = sbr.rel (%p41) target = $region21
    $region20: #{tpu_custom_call.1} parent=1 // pred_region
      %vm44 = vcmask 261120
      %45 = vst.msk [vmem:[#allocation2] sm:$0xff] %vm44, 0.0
    $region21: #{tpu_custom_call.1} parent=1 // pred_fallthru
      _
    %v46 = vld [vmem:[#allocation6] sm:$0xff]
    %v47 = vld [vmem:[#allocation6 + $0x8] sm:$0xff]
    %v48 = vld [vmem:[#allocation6 + $0x10] sm:$0xff]
    %v49 = vld [vmem:[#allocation6 + $0x18] sm:$0xff]
    %v50 = vld [vmem:[#allocation2] sm:$0xff]
    %v51 = vld [vmem:[#allocation3] sm:$0xff]
    %vm52 = vcmask 261120
    %v54 = vsel %vm52, %v50, 0
    %56 = vmatprep.subr.mxu0 0.0
    %57 = vmatpush1.msra.mxu0 0.0
    %58 = vmatprep.subr.mxu0 0.0
    %59 = vmatpush1.msra.mxu0 0.0
    %60 = vmatprep.subr.mxu0 0.0
    %61 = vmatpush1.msra.mxu0 0.0
    %62 = vmatprep.subr.mxu0 0.0
    %63 = vmatpush1.msra.mxu0 0.0
    %64 = vmatprep.subr.mxu0 0.0
    %65 = vmatpush1.msra.mxu0 0.0
    %66 = vmatprep.subr.mxu0 0.0
    %67 = vmatpush1.msra.mxu0 0.0
    %68 = vmatprep.subr.mxu0 0.0
    %69 = vmatpush1.msra.mxu0 0.0
    %70 = vmatprep.subr.mxu0 0.0
    %71 = vmatpush1.msra.mxu0 0.0
    %72 = vmatprep.subr.mxu0 0.0
    %73 = vmatpush1.msra.mxu0 0.0
    %74 = vmatprep.subr.mxu0 0.0
    %75 = vmatpush1.msra.mxu0 0.0
    %76 = vmatprep.subr.mxu0 0.0
    %77 = vmatpush1.msra.mxu0 0.0
    %78 = vmatprep.subr.mxu0 0.0
    %79 = vmatpush1.msra.mxu0 0.0
    %80 = vmatprep.subr.mxu0 0.0
    %81 = vmatpush1.msra.mxu0 %v49
    %82 = vmatprep.subr.mxu0 0.0
    %83 = vmatpush1.msra.mxu0 %v48
    %84 = vmatprep.subr.mxu0 0.0
    %85 = vmatpush1.msra.mxu0 %v47
    %86 = vmatprep.subr.mxu0 0.0
    %87 = vmatpush1.msra.mxu0 %v46
    %88 = vmatprep.subr.mxu0 0.0
    %89 = vmatpush2.msra.mxu0 0.0
    %90 = vmatprep.subr.mxu0 0.0
    %91 = vmatpush2.msra.mxu0 0.0
    %92 = vmatprep.subr.mxu0 0.0
    %93 = vmatpush2.msra.mxu0 0.0
    %94 = vmatprep.subr.mxu0 0.0
    %95 = vmatpush2.msra.mxu0 0.0
    %96 = vmatprep.subr.mxu0 0.0
    %97 = vmatpush2.msra.mxu0 0.0
    %98 = vmatprep.subr.mxu0 0.0
    %99 = vmatpush2.msra.mxu0 0.0
    %100 = vmatprep.subr.mxu0 0.0
    %101 = vmatpush2.msra.mxu0 0.0
    %102 = vmatprep.subr.mxu0 0.0
    %103 = vmatpush2.msra.mxu0 0.0
    %104 = vmatprep.subr.mxu0 0.0
    %105 = vmatpush2.msra.mxu0 0.0
    %106 = vmatprep.subr.mxu0 0.0
    %107 = vmatpush2.msra.mxu0 0.0
    %108 = vmatprep.subr.mxu0 0.0
    %109 = vmatpush2.msra.mxu0 0.0
    %110 = vmatprep.subr.mxu0 0.0
    %111 = vmatpush2.msra.mxu0 0.0
    %112 = vmatprep.subr.mxu0 0.0
    %113 = vmatpush2.msra.mxu0 0.0
    %114 = vmatprep.subr.mxu0 0.0
    %115 = vmatpush2.msra.mxu0 0.0
    %116 = vmatprep.subr.mxu0 0.0
    %117 = vmatpush2.msra.mxu0 0.0
    %118 = vmatprep.subr.mxu0 0.0
    %119 = vmatpush2.msra.mxu0 0.0
    %120 = vmatprep.mubr.f32.mxu0 0.0
    %121 = vmatmul.mubr.f32.gmra.mxu0 %v54
    %v122 = vpop.f32.mrf.mxu0
    %v123 = vadd.f32 0.0, %v122
    %v124 = vpop.f32.mrf.mxu0
    %125 = vdwg.mxu0
    %v126 = vadd.f32 %v51, %v123
    %v127 = vtanh.pop %v126
    %128 = vst.msk [vmem:[#allocation8] sm:$0xff] %vm52, %v127
    %s129 = scalar_lea.vmem [#allocation3], 8
    %v130 = vld [vmem:[%s129] sm:$0xff]
    %v132 = vsel %vm52, %v127, 0
    %134 = vmatprep.subr.mxu0 0.0
    %135 = vmatpush1.msra.mxu0 0.0
    %136 = vmatprep.subr.mxu0 0.0
    %137 = vmatpush1.msra.mxu0 0.0
    %138 = vmatprep.subr.mxu0 0.0
    %139 = vmatpush1.msra.mxu0 0.0
    %140 = vmatprep.subr.mxu0 0.0
    %141 = vmatpush1.msra.mxu0 0.0
    %142 = vmatprep.subr.mxu0 0.0
    %143 = vmatpush1.msra.mxu0 0.0
    %144 = vmatprep.subr.mxu0 0.0
    %145 = vmatpush1.msra.mxu0 0.0
    %146 = vmatprep.subr.mxu0 0.0
    %147 = vmatpush1.msra.mxu0 0.0
    %148 = vmatprep.subr.mxu0 0.0
    %149 = vmatpush1.msra.mxu0 0.0
    %150 = vmatprep.subr.mxu0 0.0
    %151 = vmatpush1.msra.mxu0 0.0
    %152 = vmatprep.subr.mxu0 0.0
    %153 = vmatpush1.msra.mxu0 0.0
    %154 = vmatprep.subr.mxu0 0.0
    %155 = vmatpush1.msra.mxu0 0.0
    %156 = vmatprep.subr.mxu0 0.0
    %157 = vmatpush1.msra.mxu0 0.0
    %158 = vmatprep.subr.mxu0 0.0
    %159 = vmatpush1.msra.mxu0 %v49
    %160 = vmatprep.subr.mxu0 0.0
    %161 = vmatpush1.msra.mxu0 %v48
    %162 = vmatprep.subr.mxu0 0.0
    %163 = vmatpush1.msra.mxu0 %v47
    %164 = vmatprep.subr.mxu0 0.0
    %165 = vmatpush1.msra.mxu0 %v46
    %166 = vmatprep.subr.mxu0 0.0
    %167 = vmatpush2.msra.mxu0 0.0
    %168 = vmatprep.subr.mxu0 0.0
    %169 = vmatpush2.msra.mxu0 0.0
    %170 = vmatprep.subr.mxu0 0.0
    %171 = vmatpush2.msra.mxu0 0.0
    %172 = vmatprep.subr.mxu0 0.0
    %173 = vmatpush2.msra.mxu0 0.0
    %174 = vmatprep.subr.mxu0 0.0
    %175 = vmatpush2.msra.mxu0 0.0
    %176 = vmatprep.subr.mxu0 0.0
    %177 = vmatpush2.msra.mxu0 0.0
    %178 = vmatprep.subr.mxu0 0.0
    %179 = vmatpush2.msra.mxu0 0.0
    %180 = vmatprep.subr.mxu0 0.0
    %181 = vmatpush2.msra.mxu0 0.0
    %182 = vmatprep.subr.mxu0 0.0
    %183 = vmatpush2.msra.mxu0 0.0
    %184 = vmatprep.subr.mxu0 0.0
    %185 = vmatpush2.msra.mxu0 0.0
    %186 = vmatprep.subr.mxu0 0.0
    %187 = vmatpush2.msra.mxu0 0.0
    %188 = vmatprep.subr.mxu0 0.0
    %189 = vmatpush2.msra.mxu0 0.0
    %190 = vmatprep.subr.mxu0 0.0
    %191 = vmatpush2.msra.mxu0 0.0
    %192 = vmatprep.subr.mxu0 0.0
    %193 = vmatpush2.msra.mxu0 0.0
    %194 = vmatprep.subr.mxu0 0.0
    %195 = vmatpush2.msra.mxu0 0.0
    %196 = vmatprep.subr.mxu0 0.0
    %197 = vmatpush2.msra.mxu0 0.0
    %198 = vmatprep.mubr.f32.mxu0 0.0
    %199 = vmatmul.mubr.f32.gmra.mxu0 %v132
    %v200 = vpop.f32.mrf.mxu0
    %v201 = vadd.f32 0.0, %v200
    %v202 = vpop.f32.mrf.mxu0
    %203 = vdwg.mxu0
    %v204 = vadd.f32 %v130, %v201
    %v205 = vtanh.pop %v204
    %s206 = scalar_lea.vmem [#allocation8], 8
    %207 = vst.msk [vmem:[%s206] sm:$0xff] %vm52, %v205
    %s208 = scalar_lea.vmem [#allocation3], 16
    %v209 = vld [vmem:[%s208] sm:$0xff]
    %v211 = vsel %vm52, %v205, 0
    %213 = vmatprep.subr.mxu0 0.0
    %214 = vmatpush1.msra.mxu0 0.0
    %215 = vmatprep.subr.mxu0 0.0
    %216 = vmatpush1.msra.mxu0 0.0
    %217 = vmatprep.subr.mxu0 0.0
    %218 = vmatpush1.msra.mxu0 0.0
    %219 = vmatprep.subr.mxu0 0.0
    %220 = vmatpush1.msra.mxu0 0.0
    %221 = vmatprep.subr.mxu0 0.0
    %222 = vmatpush1.msra.mxu0 0.0
    %223 = vmatprep.subr.mxu0 0.0
    %224 = vmatpush1.msra.mxu0 0.0
    %225 = vmatprep.subr.mxu0 0.0
    %226 = vmatpush1.msra.mxu0 0.0
    %227 = vmatprep.subr.mxu0 0.0
    %228 = vmatpush1.msra.mxu0 0.0
    %229 = vmatprep.subr.mxu0 0.0
    %230 = vmatpush1.msra.mxu0 0.0
    %231 = vmatprep.subr.mxu0 0.0
    %232 = vmatpush1.msra.mxu0 0.0
    %233 = vmatprep.subr.mxu0 0.0
    %234 = vmatpush1.msra.mxu0 0.0
    %235 = vmatprep.subr.mxu0 0.0
    %236 = vmatpush1.msra.mxu0 0.0
    %237 = vmatprep.subr.mxu0 0.0
    %238 = vmatpush1.msra.mxu0 %v49
    %239 = vmatprep.subr.mxu0 0.0
    %240 = vmatpush1.msra.mxu0 %v48
    %241 = vmatprep.subr.mxu0 0.0
    %242 = vmatpush1.msra.mxu0 %v47
    %243 = vmatprep.subr.mxu0 0.0
    %244 = vmatpush1.msra.mxu0 %v46
    %245 = vmatprep.subr.mxu0 0.0
    %246 = vmatpush2.msra.mxu0 0.0
    %247 = vmatprep.subr.mxu0 0.0
    %248 = vmatpush2.msra.mxu0 0.0
    %249 = vmatprep.subr.mxu0 0.0
    %250 = vmatpush2.msra.mxu0 0.0
    %251 = vmatprep.subr.mxu0 0.0
    %252 = vmatpush2.msra.mxu0 0.0
    %253 = vmatprep.subr.mxu0 0.0
    %254 = vmatpush2.msra.mxu0 0.0
    %255 = vmatprep.subr.mxu0 0.0
    %256 = vmatpush2.msra.mxu0 0.0
    %257 = vmatprep.subr.mxu0 0.0
    %258 = vmatpush2.msra.mxu0 0.0
    %259 = vmatprep.subr.mxu0 0.0
    %260 = vmatpush2.msra.mxu0 0.0
    %261 = vmatprep.subr.mxu0 0.0
    %262 = vmatpush2.msra.mxu0 0.0
    %263 = vmatprep.subr.mxu0 0.0
    %264 = vmatpush2.msra.mxu0 0.0
    %265 = vmatprep.subr.mxu0 0.0
    %266 = vmatpush2.msra.mxu0 0.0
    %267 = vmatprep.subr.mxu0 0.0
    %268 = vmatpush2.msra.mxu0 0.0
    %269 = vmatprep.subr.mxu0 0.0
    %270 = vmatpush2.msra.mxu0 0.0
    %271 = vmatprep.subr.mxu0 0.0
    %272 = vmatpush2.msra.mxu0 0.0
    %273 = vmatprep.subr.mxu0 0.0
    %274 = vmatpush2.msra.mxu0 0.0
    %275 = vmatprep.subr.mxu0 0.0
    %276 = vmatpush2.msra.mxu0 0.0
    %277 = vmatprep.mubr.f32.mxu0 0.0
    %278 = vmatmul.mubr.f32.gmra.mxu0 %v211
    %v279 = vpop.f32.mrf.mxu0
    %v280 = vadd.f32 0.0, %v279
    %v281 = vpop.f32.mrf.mxu0
    %282 = vdwg.mxu0
    %v283 = vadd.f32 %v209, %v280
    %v284 = vtanh.pop %v283
    %s285 = scalar_lea.vmem [#allocation8], 16
    %286 = vst.msk [vmem:[%s285] sm:$0xff] %vm52, %v284
    %s287 = scalar_lea.vmem [#allocation3], 24
    %v288 = vld [vmem:[%s287] sm:$0xff]
    %v290 = vsel %vm52, %v284, 0
    %292 = vmatprep.subr.mxu0 0.0
    %293 = vmatpush1.msra.mxu0 0.0
    %294 = vmatprep.subr.mxu0 0.0
    %295 = vmatpush1.msra.mxu0 0.0
    %296 = vmatprep.subr.mxu0 0.0
    %297 = vmatpush1.msra.mxu0 0.0
    %298 = vmatprep.subr.mxu0 0.0
    %299 = vmatpush1.msra.mxu0 0.0
    %300 = vmatprep.subr.mxu0 0.0
    %301 = vmatpush1.msra.mxu0 0.0
    %302 = vmatprep.subr.mxu0 0.0
    %303 = vmatpush1.msra.mxu0 0.0
    %304 = vmatprep.subr.mxu0 0.0
    %305 = vmatpush1.msra.mxu0 0.0
    %306 = vmatprep.subr.mxu0 0.0
    %307 = vmatpush1.msra.mxu0 0.0
    %308 = vmatprep.subr.mxu0 0.0
    %309 = vmatpush1.msra.mxu0 0.0
    %310 = vmatprep.subr.mxu0 0.0
    %311 = vmatpush1.msra.mxu0 0.0
    %312 = vmatprep.subr.mxu0 0.0
    %313 = vmatpush1.msra.mxu0 0.0
    %314 = vmatprep.subr.mxu0 0.0
    %315 = vmatpush1.msra.mxu0 0.0
    %316 = vmatprep.subr.mxu0 0.0
    %317 = vmatpush1.msra.mxu0 %v49
    %318 = vmatprep.subr.mxu0 0.0
    %319 = vmatpush1.msra.mxu0 %v48
    %320 = vmatprep.subr.mxu0 0.0
    %321 = vmatpush1.msra.mxu0 %v47
    %322 = vmatprep.subr.mxu0 0.0
    %323 = vmatpush1.msra.mxu0 %v46
    %324 = vmatprep.subr.mxu0 0.0
    %325 = vmatpush2.msra.mxu0 0.0
    %326 = vmatprep.subr.mxu0 0.0
    %327 = vmatpush2.msra.mxu0 0.0
    %328 = vmatprep.subr.mxu0 0.0
    %329 = vmatpush2.msra.mxu0 0.0
    %330 = vmatprep.subr.mxu0 0.0
    %331 = vmatpush2.msra.mxu0 0.0
    %332 = vmatprep.subr.mxu0 0.0
    %333 = vmatpush2.msra.mxu0 0.0
    %334 = vmatprep.subr.mxu0 0.0
    %335 = vmatpush2.msra.mxu0 0.0
    %336 = vmatprep.subr.mxu0 0.0
    %337 = vmatpush2.msra.mxu0 0.0
    %338 = vmatprep.subr.mxu0 0.0
    %339 = vmatpush2.msra.mxu0 0.0
    %340 = vmatprep.subr.mxu0 0.0
    %341 = vmatpush2.msra.mxu0 0.0
    %342 = vmatprep.subr.mxu0 0.0
    %343 = vmatpush2.msra.mxu0 0.0
    %344 = vmatprep.subr.mxu0 0.0
    %345 = vmatpush2.msra.mxu0 0.0
    %346 = vmatprep.subr.mxu0 0.0
    %347 = vmatpush2.msra.mxu0 0.0
    %348 = vmatprep.subr.mxu0 0.0
    %349 = vmatpush2.msra.mxu0 0.0
    %350 = vmatprep.subr.mxu0 0.0
    %351 = vmatpush2.msra.mxu0 0.0
    %352 = vmatprep.subr.mxu0 0.0
    %353 = vmatpush2.msra.mxu0 0.0
    %354 = vmatprep.subr.mxu0 0.0
    %355 = vmatpush2.msra.mxu0 0.0
    %356 = vmatprep.mubr.f32.mxu0 0.0
    %357 = vmatmul.mubr.f32.gmra.mxu0 %v290
    %v358 = vpop.f32.mrf.mxu0
    %v359 = vadd.f32 0.0, %v358
    %v360 = vpop.f32.mrf.mxu0
    %361 = vdwg.mxu0
    %v362 = vadd.f32 %v288, %v359
    %v363 = vtanh.pop %v362
    %s364 = scalar_lea.vmem [#allocation8], 24
    %365 = vst.msk [vmem:[%s364] sm:$0xff] %vm52, %v363
    %s366 = scalar_lea.vmem [#allocation3], 32
    %v367 = vld [vmem:[%s366] sm:$0xff]
    %v369 = vsel %vm52, %v363, 0
    %371 = vmatprep.subr.mxu0 0.0
    %372 = vmatpush1.msra.mxu0 0.0
    %373 = vmatprep.subr.mxu0 0.0
    %374 = vmatpush1.msra.mxu0 0.0
    %375 = vmatprep.subr.mxu0 0.0
    %376 = vmatpush1.msra.mxu0 0.0
    %377 = vmatprep.subr.mxu0 0.0
    %378 = vmatpush1.msra.mxu0 0.0
    %379 = vmatprep.subr.mxu0 0.0
    %380 = vmatpush1.msra.mxu0 0.0
    %381 = vmatprep.subr.mxu0 0.0
    %382 = vmatpush1.msra.mxu0 0.0
    %383 = vmatprep.subr.mxu0 0.0
    %384 = vmatpush1.msra.mxu0 0.0
    %385 = vmatprep.subr.mxu0 0.0
    %386 = vmatpush1.msra.mxu0 0.0
    %387 = vmatprep.subr.mxu0 0.0
    %388 = vmatpush1.msra.mxu0 0.0
    %389 = vmatprep.subr.mxu0 0.0
    %390 = vmatpush1.msra.mxu0 0.0
    %391 = vmatprep.subr.mxu0 0.0
    %392 = vmatpush1.msra.mxu0 0.0
    %393 = vmatprep.subr.mxu0 0.0
    %394 = vmatpush1.msra.mxu0 0.0
    %395 = vmatprep.subr.mxu0 0.0
    %396 = vmatpush1.msra.mxu0 %v49
    %397 = vmatprep.subr.mxu0 0.0
    %398 = vmatpush1.msra.mxu0 %v48
    %399 = vmatprep.subr.mxu0 0.0
    %400 = vmatpush1.msra.mxu0 %v47
    %401 = vmatprep.subr.mxu0 0.0
    %402 = vmatpush1.msra.mxu0 %v46
    %403 = vmatprep.subr.mxu0 0.0
    %404 = vmatpush2.msra.mxu0 0.0
    %405 = vmatprep.subr.mxu0 0.0
    %406 = vmatpush2.msra.mxu0 0.0
    %407 = vmatprep.subr.mxu0 0.0
    %408 = vmatpush2.msra.mxu0 0.0
    %409 = vmatprep.subr.mxu0 0.0
    %410 = vmatpush2.msra.mxu0 0.0
    %411 = vmatprep.subr.mxu0 0.0
    %412 = vmatpush2.msra.mxu0 0.0
    %413 = vmatprep.subr.mxu0 0.0
    %414 = vmatpush2.msra.mxu0 0.0
    %415 = vmatprep.subr.mxu0 0.0
    %416 = vmatpush2.msra.mxu0 0.0
    %417 = vmatprep.subr.mxu0 0.0
    %418 = vmatpush2.msra.mxu0 0.0
    %419 = vmatprep.subr.mxu0 0.0
    %420 = vmatpush2.msra.mxu0 0.0
    %421 = vmatprep.subr.mxu0 0.0
    %422 = vmatpush2.msra.mxu0 0.0
    %423 = vmatprep.subr.mxu0 0.0
    %424 = vmatpush2.msra.mxu0 0.0
    %425 = vmatprep.subr.mxu0 0.0
    %426 = vmatpush2.msra.mxu0 0.0
    %427 = vmatprep.subr.mxu0 0.0
    %428 = vmatpush2.msra.mxu0 0.0
    %429 = vmatprep.subr.mxu0 0.0
    %430 = vmatpush2.msra.mxu0 0.0
    %431 = vmatprep.subr.mxu0 0.0
    %432 = vmatpush2.msra.mxu0 0.0
    %433 = vmatprep.subr.mxu0 0.0
    %434 = vmatpush2.msra.mxu0 0.0
    %435 = vmatprep.mubr.f32.mxu0 0.0
    %436 = vmatmul.mubr.f32.gmra.mxu0 %v369
    %v437 = vpop.f32.mrf.mxu0
    %v438 = vadd.f32 0.0, %v437
    %v439 = vpop.f32.mrf.mxu0
    %440 = vdwg.mxu0
    %v441 = vadd.f32 %v367, %v438
    %v442 = vtanh.pop %v441
    %s443 = scalar_lea.vmem [#allocation8], 32
    %444 = vst.msk [vmem:[%s443] sm:$0xff] %vm52, %v442
    %s445 = scalar_lea.vmem [#allocation3], 40
    %v446 = vld [vmem:[%s445] sm:$0xff]
    %v448 = vsel %vm52, %v442, 0
    %450 = vmatprep.subr.mxu0 0.0
    %451 = vmatpush1.msra.mxu0 0.0
    %452 = vmatprep.subr.mxu0 0.0
    %453 = vmatpush1.msra.mxu0 0.0
    %454 = vmatprep.subr.mxu0 0.0
    %455 = vmatpush1.msra.mxu0 0.0
    %456 = vmatprep.subr.mxu0 0.0
    %457 = vmatpush1.msra.mxu0 0.0
    %458 = vmatprep.subr.mxu0 0.0
    %459 = vmatpush1.msra.mxu0 0.0
    %460 = vmatprep.subr.mxu0 0.0
    %461 = vmatpush1.msra.mxu0 0.0
    %462 = vmatprep.subr.mxu0 0.0
    %463 = vmatpush1.msra.mxu0 0.0
    %464 = vmatprep.subr.mxu0 0.0
    %465 = vmatpush1.msra.mxu0 0.0
    %466 = vmatprep.subr.mxu0 0.0
    %467 = vmatpush1.msra.mxu0 0.0
    %468 = vmatprep.subr.mxu0 0.0
    %469 = vmatpush1.msra.mxu0 0.0
    %470 = vmatprep.subr.mxu0 0.0
    %471 = vmatpush1.msra.mxu0 0.0
    %472 = vmatprep.subr.mxu0 0.0
    %473 = vmatpush1.msra.mxu0 0.0
    %474 = vmatprep.subr.mxu0 0.0
    %475 = vmatpush1.msra.mxu0 %v49
    %476 = vmatprep.subr.mxu0 0.0
    %477 = vmatpush1.msra.mxu0 %v48
    %478 = vmatprep.subr.mxu0 0.0
    %479 = vmatpush1.msra.mxu0 %v47
    %480 = vmatprep.subr.mxu0 0.0
    %481 = vmatpush1.msra.mxu0 %v46
    %482 = vmatprep.subr.mxu0 0.0
    %483 = vmatpush2.msra.mxu0 0.0
    %484 = vmatprep.subr.mxu0 0.0
    %485 = vmatpush2.msra.mxu0 0.0
    %486 = vmatprep.subr.mxu0 0.0
    %487 = vmatpush2.msra.mxu0 0.0
    %488 = vmatprep.subr.mxu0 0.0
    %489 = vmatpush2.msra.mxu0 0.0
    %490 = vmatprep.subr.mxu0 0.0
    %491 = vmatpush2.msra.mxu0 0.0
    %492 = vmatprep.subr.mxu0 0.0
    %493 = vmatpush2.msra.mxu0 0.0
    %494 = vmatprep.subr.mxu0 0.0
    %495 = vmatpush2.msra.mxu0 0.0
    %496 = vmatprep.subr.mxu0 0.0
    %497 = vmatpush2.msra.mxu0 0.0
    %498 = vmatprep.subr.mxu0 0.0
    %499 = vmatpush2.msra.mxu0 0.0
    %500 = vmatprep.subr.mxu0 0.0
    %501 = vmatpush2.msra.mxu0 0.0
    %502 = vmatprep.subr.mxu0 0.0
    %503 = vmatpush2.msra.mxu0 0.0
    %504 = vmatprep.subr.mxu0 0.0
    %505 = vmatpush2.msra.mxu0 0.0
    %506 = vmatprep.subr.mxu0 0.0
    %507 = vmatpush2.msra.mxu0 0.0
    %508 = vmatprep.subr.mxu0 0.0
    %509 = vmatpush2.msra.mxu0 0.0
    %510 = vmatprep.subr.mxu0 0.0
    %511 = vmatpush2.msra.mxu0 0.0
    %512 = vmatprep.subr.mxu0 0.0
    %513 = vmatpush2.msra.mxu0 0.0
    %514 = vmatprep.mubr.f32.mxu0 0.0
    %515 = vmatmul.mubr.f32.gmra.mxu0 %v448
    %v516 = vpop.f32.mrf.mxu0
    %v517 = vadd.f32 0.0, %v516
    %v518 = vpop.f32.mrf.mxu0
    %519 = vdwg.mxu0
    %v520 = vadd.f32 %v446, %v517
    %v521 = vtanh.pop %v520
    %s522 = scalar_lea.vmem [#allocation8], 40
    %523 = vst.msk [vmem:[%s522] sm:$0xff] %vm52, %v521
    %s524 = scalar_lea.vmem [#allocation3], 48
    %v525 = vld [vmem:[%s524] sm:$0xff]
    %v527 = vsel %vm52, %v521, 0
    %529 = vmatprep.subr.mxu0 0.0
    %530 = vmatpush1.msra.mxu0 0.0
    %531 = vmatprep.subr.mxu0 0.0
    %532 = vmatpush1.msra.mxu0 0.0
    %533 = vmatprep.subr.mxu0 0.0
    %534 = vmatpush1.msra.mxu0 0.0
    %535 = vmatprep.subr.mxu0 0.0
    %536 = vmatpush1.msra.mxu0 0.0
    %537 = vmatprep.subr.mxu0 0.0
    %538 = vmatpush1.msra.mxu0 0.0
    %539 = vmatprep.subr.mxu0 0.0
    %540 = vmatpush1.msra.mxu0 0.0
    %541 = vmatprep.subr.mxu0 0.0
    %542 = vmatpush1.msra.mxu0 0.0
    %543 = vmatprep.subr.mxu0 0.0
    %544 = vmatpush1.msra.mxu0 0.0
    %545 = vmatprep.subr.mxu0 0.0
    %546 = vmatpush1.msra.mxu0 0.0
    %547 = vmatprep.subr.mxu0 0.0
    %548 = vmatpush1.msra.mxu0 0.0
    %549 = vmatprep.subr.mxu0 0.0
    %550 = vmatpush1.msra.mxu0 0.0
    %551 = vmatprep.subr.mxu0 0.0
    %552 = vmatpush1.msra.mxu0 0.0
    %553 = vmatprep.subr.mxu0 0.0
    %554 = vmatpush1.msra.mxu0 %v49
    %555 = vmatprep.subr.mxu0 0.0
    %556 = vmatpush1.msra.mxu0 %v48
    %557 = vmatprep.subr.mxu0 0.0
    %558 = vmatpush1.msra.mxu0 %v47
    %559 = vmatprep.subr.mxu0 0.0
    %560 = vmatpush1.msra.mxu0 %v46
    %561 = vmatprep.subr.mxu0 0.0
    %562 = vmatpush2.msra.mxu0 0.0
    %563 = vmatprep.subr.mxu0 0.0
    %564 = vmatpush2.msra.mxu0 0.0
    %565 = vmatprep.subr.mxu0 0.0
    %566 = vmatpush2.msra.mxu0 0.0
    %567 = vmatprep.subr.mxu0 0.0
    %568 = vmatpush2.msra.mxu0 0.0
    %569 = vmatprep.subr.mxu0 0.0
    %570 = vmatpush2.msra.mxu0 0.0
    %571 = vmatprep.subr.mxu0 0.0
    %572 = vmatpush2.msra.mxu0 0.0
    %573 = vmatprep.subr.mxu0 0.0
    %574 = vmatpush2.msra.mxu0 0.0
    %575 = vmatprep.subr.mxu0 0.0
    %576 = vmatpush2.msra.mxu0 0.0
    %577 = vmatprep.subr.mxu0 0.0
    %578 = vmatpush2.msra.mxu0 0.0
    %579 = vmatprep.subr.mxu0 0.0
    %580 = vmatpush2.msra.mxu0 0.0
    %581 = vmatprep.subr.mxu0 0.0
    %582 = vmatpush2.msra.mxu0 0.0
    %583 = vmatprep.subr.mxu0 0.0
    %584 = vmatpush2.msra.mxu0 0.0
    %585 = vmatprep.subr.mxu0 0.0
    %586 = vmatpush2.msra.mxu0 0.0
    %587 = vmatprep.subr.mxu0 0.0
    %588 = vmatpush2.msra.mxu0 0.0
    %589 = vmatprep.subr.mxu0 0.0
    %590 = vmatpush2.msra.mxu0 0.0
    %591 = vmatprep.subr.mxu0 0.0
    %592 = vmatpush2.msra.mxu0 0.0
    %593 = vmatprep.mubr.f32.mxu0 0.0
    %594 = vmatmul.mubr.f32.gmra.mxu0 %v527
    %v595 = vpop.f32.mrf.mxu0
    %v596 = vadd.f32 0.0, %v595
    %v597 = vpop.f32.mrf.mxu0
    %598 = vdwg.mxu0
    %v599 = vadd.f32 %v525, %v596
    %v600 = vtanh.pop %v599
    %s601 = scalar_lea.vmem [#allocation8], 48
    %602 = vst.msk [vmem:[%s601] sm:$0xff] %vm52, %v600
    %s603 = scalar_lea.vmem [#allocation3], 56
    %v604 = vld [vmem:[%s603] sm:$0xff]
    %v606 = vsel %vm52, %v600, 0
    %608 = vmatprep.subr.mxu0 0.0
    %609 = vmatpush1.msra.mxu0 0.0
    %610 = vmatprep.subr.mxu0 0.0
    %611 = vmatpush1.msra.mxu0 0.0
    %612 = vmatprep.subr.mxu0 0.0
    %613 = vmatpush1.msra.mxu0 0.0
    %614 = vmatprep.subr.mxu0 0.0
    %615 = vmatpush1.msra.mxu0 0.0
    %616 = vmatprep.subr.mxu0 0.0
    %617 = vmatpush1.msra.mxu0 0.0
    %618 = vmatprep.subr.mxu0 0.0
    %619 = vmatpush1.msra.mxu0 0.0
    %620 = vmatprep.subr.mxu0 0.0
    %621 = vmatpush1.msra.mxu0 0.0
    %622 = vmatprep.subr.mxu0 0.0
    %623 = vmatpush1.msra.mxu0 0.0
    %624 = vmatprep.subr.mxu0 0.0
    %625 = vmatpush1.msra.mxu0 0.0
    %626 = vmatprep.subr.mxu0 0.0
    %627 = vmatpush1.msra.mxu0 0.0
    %628 = vmatprep.subr.mxu0 0.0
    %629 = vmatpush1.msra.mxu0 0.0
    %630 = vmatprep.subr.mxu0 0.0
    %631 = vmatpush1.msra.mxu0 0.0
    %632 = vmatprep.subr.mxu0 0.0
    %633 = vmatpush1.msra.mxu0 %v49
    %634 = vmatprep.subr.mxu0 0.0
    %635 = vmatpush1.msra.mxu0 %v48
    %636 = vmatprep.subr.mxu0 0.0
    %637 = vmatpush1.msra.mxu0 %v47
    %638 = vmatprep.subr.mxu0 0.0
    %639 = vmatpush1.msra.mxu0 %v46
    %640 = vmatprep.subr.mxu0 0.0
    %641 = vmatpush2.msra.mxu0 0.0
    %642 = vmatprep.subr.mxu0 0.0
    %643 = vmatpush2.msra.mxu0 0.0
    %644 = vmatprep.subr.mxu0 0.0
    %645 = vmatpush2.msra.mxu0 0.0
    %646 = vmatprep.subr.mxu0 0.0
    %647 = vmatpush2.msra.mxu0 0.0
    %648 = vmatprep.subr.mxu0 0.0
    %649 = vmatpush2.msra.mxu0 0.0
    %650 = vmatprep.subr.mxu0 0.0
    %651 = vmatpush2.msra.mxu0 0.0
    %652 = vmatprep.subr.mxu0 0.0
    %653 = vmatpush2.msra.mxu0 0.0
    %654 = vmatprep.subr.mxu0 0.0
    %655 = vmatpush2.msra.mxu0 0.0
    %656 = vmatprep.subr.mxu0 0.0
    %657 = vmatpush2.msra.mxu0 0.0
    %658 = vmatprep.subr.mxu0 0.0
    %659 = vmatpush2.msra.mxu0 0.0
    %660 = vmatprep.subr.mxu0 0.0
    %661 = vmatpush2.msra.mxu0 0.0
    %662 = vmatprep.subr.mxu0 0.0
    %663 = vmatpush2.msra.mxu0 0.0
    %664 = vmatprep.subr.mxu0 0.0
    %665 = vmatpush2.msra.mxu0 0.0
    %666 = vmatprep.subr.mxu0 0.0
    %667 = vmatpush2.msra.mxu0 0.0
    %668 = vmatprep.subr.mxu0 0.0
    %669 = vmatpush2.msra.mxu0 0.0
    %670 = vmatprep.subr.mxu0 0.0
    %671 = vmatpush2.msra.mxu0 0.0
    %672 = vmatprep.mubr.f32.mxu0 0.0
    %673 = vmatmul.mubr.f32.gmra.mxu0 %v606
    %v674 = vpop.f32.mrf.mxu0
    %v675 = vadd.f32 0.0, %v674
    %v676 = vpop.f32.mrf.mxu0
    %677 = vdwg.mxu0
    %v678 = vadd.f32 %v604, %v675
    %v679 = vtanh.pop %v678
    %s680 = scalar_lea.vmem [#allocation8], 56
    %681 = vst.msk [vmem:[%s680] sm:$0xff] %vm52, %v679
    %682 = vst.msk [vmem:[#allocation2] sm:$0xff] %vm52, %v679
    // Predicated region
    $region22: #{tpu_custom_call.1} parent=1 // pred_check
      _
    $region23: #{tpu_custom_call.1} parent=1 // pred_check_branch
      %684 = sbr.rel (0) target = $region25
    $region24: #{tpu_custom_call.1} parent=1 // pred_region
      %s686 = ssub.s32 1024, 1024
      %687 = vsyncadd [#allocation5], %s686
      %s688 = sshll.u32 [#allocation8], 4
      %s689 = int_to_ptr.vmem [resolvable:$true] %s688
      %694 = dma.vmem_to_hbm [thread:$0]  %s689, 1024, %s2, [#allocation5], 128, 128, 8
    $region25: #{tpu_custom_call.1} parent=1 // pred_fallthru
      _
    // Predicated region
    $region26: #{tpu_custom_call.1} parent=1 // pred_check
      _
    $region27: #{tpu_custom_call.1} parent=1 // pred_check_branch
      %696 = sbr.rel (0) target = $region29
    $region28: #{tpu_custom_call.1} parent=1 // pred_region
      %697 = dma.done [#allocation5], 1024
    $region29: #{tpu_custom_call.1} parent=1 // pred_fallthru
      _
    %698 = vsyncpa [#allocation4], 1
    %699 = vsyncpa [#allocation7], 1
    %700 = vsyncpa [#allocation5], 1

</llo_original>
